<compile_context>
chip_gen: v6e
topology: v6e:2x2x1
jax: 0.10.0
libtpu: 0.0.40
codegen_flags: <defaults>
</compile_context>

<pallas_src>
import functools

import jax
import jax.numpy as jnp
from jax.experimental import pallas as pl
from jax.experimental.pallas import tpu as pltpu

# Tile caps for the im2col matmul path.  A dim that fits under its cap is taken
# as one full-extent block (no padding); otherwise the largest granule-multiple
# tile <= cap dividing the rounded-up dim is used.
_TM_CAP = 256
_TN_CAP = 256
_TK_CAP = 1024


def _round_up(x, m):
    return (x + m - 1) // m * m


def _query_vmem_limit():
    """Generation-aware scoped-VMEM limit (v7x has 64 MiB physical VMEM)."""
    cap = 128 * 1024 * 1024
    try:
        info = pltpu.get_tpu_info()
        cap = int(getattr(info, "vmem_capacity_bytes", cap))
    except Exception:
        pass
    return max(16 * 1024 * 1024, min(cap // 2, 64 * 1024 * 1024))


_VMEM_LIMIT = _query_vmem_limit()


def _cparams(semantics):
    return pltpu.CompilerParams(dimension_semantics=semantics,
                                vmem_limit_bytes=_VMEM_LIMIT)


def _tile(d, unit, cap):
    """Pick (tile, padded_dim) for one matmul dimension."""
    if d <= cap:
        return d, d                      # single full-extent block, no padding
    dp = _round_up(d, unit)
    best, t = unit, unit
    while t <= cap:
        if dp % t == 0:
            best = t
        t += unit
    return best, dp


# ----------------------------------------------------------------------------
# Kernel 1: tiled matmul fused with bias (+ optional residual) (+ optional ReLU)
# bf16 MXU inputs, f32 accumulation, reduction axis last in the grid.
# ----------------------------------------------------------------------------
def _mm_kernel(a_ref, b_ref, bias_ref, *rest, apply_relu, has_residual):
    if has_residual:
        res_ref, o_ref, acc_ref = rest
    else:
        o_ref, acc_ref = rest
    k = pl.program_id(2)

    @pl.when(k == 0)
    def _():
        acc_ref[...] = jnp.zeros_like(acc_ref)

    acc_ref[...] += jnp.dot(a_ref[...], b_ref[...],
                            preferred_element_type=jnp.float32)

    @pl.when(k == pl.num_programs(2) - 1)
    def _():
        y = acc_ref[...] + bias_ref[...]
        if has_residual:
            y = y + res_ref[...].astype(jnp.float32)
        if apply_relu:
            y = jnp.maximum(y, 0.0)
        o_ref[...] = y.astype(o_ref.dtype)


def fused_matmul(a, b, bias, residual=None, relu=True, out_dtype=jnp.bfloat16):
    """maybe_relu(a @ b + bias (+ residual)) — bf16 MXU, f32 accumulation."""
    M, K = a.shape
    K2, N = b.shape
    assert K == K2
    tm, Mp = _tile(M, 8, _TM_CAP)
    tn, Np = _tile(N, 128, _TN_CAP)
    tk, Kp = _tile(K, 128, _TK_CAP)

    # Never emit a single-program parallel grid (v7x has 2 TensorCores, and a
    # single step also disables the software pipeline).
    if (Mp // tm) * (Np // tn) == 1:
        if Np >= 256 and (Np // 2) % 128 == 0:
            tn = Np // 2
        elif Mp >= 16 and (Mp // 2) % 8 == 0:
            tm = Mp // 2

    a_p = a.astype(jnp.bfloat16)
    b_p = b.astype(jnp.bfloat16)
    if (Mp, Kp) != (M, K):
        a_p = jnp.pad(a_p, ((0, Mp - M), (0, Kp - K)))
    if (Kp, Np) != (K, N):
        b_p = jnp.pad(b_p, ((0, Kp - K), (0, Np - N)))
    bias_p = bias.astype(jnp.float32).reshape(1, N)
    if Np != N:
        bias_p = jnp.pad(bias_p, ((0, 0), (0, Np - N)))

    in_specs = [
        pl.BlockSpec((tm, tk), lambda i, j, k: (i, k)),
        pl.BlockSpec((tk, tn), lambda i, j, k: (k, j)),
        pl.BlockSpec((1, tn), lambda i, j, k: (0, j)),
    ]
    operands = [a_p, b_p, bias_p]
    has_residual = residual is not None
    if has_residual:
        r_p = residual.astype(jnp.bfloat16)
        if (Mp, Np) != (M, N):
            r_p = jnp.pad(r_p, ((0, Mp - M), (0, Np - N)))
        in_specs.append(pl.BlockSpec((tm, tn), lambda i, j, k: (i, j)))
        operands.append(r_p)

    kernel = functools.partial(_mm_kernel, apply_relu=relu,
                               has_residual=has_residual)
    out = pl.pallas_call(
        kernel,
        out_shape=jax.ShapeDtypeStruct((Mp, Np), out_dtype),
        grid_spec=pltpu.PrefetchScalarGridSpec(
            num_scalar_prefetch=0,
            grid=(Mp // tm, Np // tn, Kp // tk),
            in_specs=in_specs,
            out_specs=pl.BlockSpec((tm, tn), lambda i, j, k: (i, j)),
            scratch_shapes=[pltpu.VMEM((tm, tn), jnp.float32)],
        ),
        compiler_params=_cparams(("parallel", "parallel", "arbitrary")),
    )(*operands)
    if (Mp, Np) != (M, N):
        out = out[:M, :N]
    return out


# ----------------------------------------------------------------------------
# Kernel 2: direct stride-1 conv, kw-folded.  The host builds a bf16
# (N, Hp, Wo, k*Cin) tensor (kw taps concatenated along channels); the kernel
# unrolls only kh: per kh one cheap row-slice + one K = k*Cin matmul, summed in
# registers.  Grid = (batch, Cout tiles) — per-image accumulator, >= 2 programs.
# ----------------------------------------------------------------------------
def _direct_conv_kernel(x_ref, w_ref, bias_ref, *rest, k, out_h, out_w,
                        apply_relu, has_residual):
    if has_residual:
        res_ref, o_ref = rest
    else:
        (o_ref,) = rest
    m = out_h * out_w
    kc = x_ref.shape[-1]

    acc = None
    for kh in range(k):
        lhs = x_ref[:, kh:kh + out_h, :, :].reshape(m, kc)     # bf16, no cast
        p = jnp.dot(lhs, w_ref[kh], preferred_element_type=jnp.float32)
        acc = p if acc is None else acc + p

    y = acc + bias_ref[...]
    if has_residual:
        y = y + res_ref[...].astype(jnp.float32)
    if apply_relu:
        y = jnp.maximum(y, 0.0)
    o_ref[...] = y.astype(o_ref.dtype)


def _direct_conv(x, Wf, bias_1d, padding, relu, res_flat, k):
    N, H, Wd, Cx = x.shape
    Coutp = Wf.shape[0]
    Ho = H + 2 * padding - k + 1
    Wo = Wd + 2 * padding - k + 1
    Hp = H + 2 * padding
    M = N * Ho * Wo
    KC = k * Cx

    # bf16 staging; kw taps folded along channels -> (N, Hp, Wo, k*Cx).
    xp = jnp.pad(x.astype(jnp.bfloat16),
                 ((0, 0), (padding, padding), (padding, padding), (0, 0)))
    xkw = jnp.concatenate([xp[:, :, kw:kw + Wo, :] for kw in range(k)], axis=-1)

    # Weight rows match (kw, cin) ordering of xkw: (kh, k*Cx, Coutp).
    w = jnp.transpose(Wf, (2, 3, 1, 0)).reshape(k, KC, Coutp).astype(jnp.bfloat16)
    bias_p = bias_1d.astype(jnp.float32).reshape(1, Coutp)

    tn = Coutp if Coutp <= 256 else 256
    if N * (Coutp // tn) < 2 and tn % 256 == 0:
        tn //= 2
    grid = (N, Coutp // tn)

    in_specs = [
        pl.BlockSpec((1, Hp, Wo, KC), lambda b, j: (b, 0, 0, 0)),
        pl.BlockSpec((k, KC, tn), lambda b, j: (0, 0, j)),
        pl.BlockSpec((1, tn), lambda b, j: (0, j)),
    ]
    operands = [xkw, w, bias_p]
    has_residual = res_flat is not None
    if has_residual:
        in_specs.append(pl.BlockSpec((Ho * Wo, tn), lambda b, j: (b, j)))
        operands.append(res_flat)

    kernel = functools.partial(_direct_conv_kernel, k=k, out_h=Ho, out_w=Wo,
                               apply_relu=relu, has_residual=has_residual)
    out = pl.pallas_call(
        kernel,
        out_shape=jax.ShapeDtypeStruct((M, Coutp), jnp.bfloat16),
        grid_spec=pltpu.PrefetchScalarGridSpec(
            num_scalar_prefetch=0,
            grid=grid,
            in_specs=in_specs,
            out_specs=pl.BlockSpec((Ho * Wo, tn), lambda b, j: (b, j)),
        ),
        compiler_params=_cparams(("parallel", "parallel")),
    )(*operands)
    return out


# ----------------------------------------------------------------------------
# Kernel 3: fused global-average-pool + Linear head, f32 end-to-end.
# ----------------------------------------------------------------------------
def _gap_linear_kernel(x_ref, w_ref, b_ref, o_ref, *, inv_hw):
    pooled = jnp.sum(x_ref[...].astype(jnp.float32), axis=1) * inv_hw   # (N, C)
    o_ref[...] = (jnp.dot(pooled, w_ref[...],
                          preferred_element_type=jnp.float32) + b_ref[...])


def gap_linear(x_nhwc, w, b):
    N, Ho, Wo, C = x_nhwc.shape
    HW = Ho * Wo
    ncls = w.shape[0]
    x3 = x_nhwc.reshape(N, HW, C)
    wt = w.T.astype(jnp.float32)                      # (C, ncls), stays f32
    b2 = b.astype(jnp.float32).reshape(1, ncls)
    kernel = functools.partial(_gap_linear_kernel, inv_hw=1.0 / HW)
    return pl.pallas_call(
        kernel,
        out_shape=jax.ShapeDtypeStruct((N, ncls), jnp.float32),
        grid_spec=pltpu.PrefetchScalarGridSpec(
            num_scalar_prefetch=0,
            grid=(1,),
            in_specs=[pl.BlockSpec((N, HW, C), lambda i: (0, 0, 0)),
                      pl.BlockSpec((C, ncls), lambda i: (0, 0)),
                      pl.BlockSpec((1, ncls), lambda i: (0, 0))],
            out_specs=pl.BlockSpec((N, ncls), lambda i: (0, 0)),
        ),
        compiler_params=_cparams(("arbitrary",)),
    )(x3, wt, b2)


# ----------------------------------------------------------------------------
# Glue: im2col (strided / tiny-spatial / low-Cin path), PHConv weights, BN fold.
# Activations keep channels padded to a multiple of 128 (exact zeros), so every
# conv output store is lane-dense and no slice round trips are needed.
# ----------------------------------------------------------------------------
def _im2col(x, k, stride, padding):
    """x: (N,H,W,C) bf16 -> patches (N,Ho,Wo,k*k*C), blocks ordered (kh,kw)."""
    N, H, W, C = x.shape
    xp = jnp.pad(x, ((0, 0), (padding, padding), (padding, padding), (0, 0)))
    Ho = (H + 2 * padding - k) // stride + 1
    Wo = (W + 2 * padding - k) // stride + 1
    cols = []
    for kh in range(k):
        for kw in range(k):
            cols.append(xp[:, kh:kh + stride * Ho:stride,
                           kw:kw + stride * Wo:stride, :])
    return jnp.concatenate(cols, axis=-1)


def conv_bn(x, W, scale, bias, stride, padding, relu=True, residual=None):
    """PHConv (materialized weight) + eval-mode BN (+residual)(+ReLU), NHWC.

    `x` may have zero-padded channels (Cx >= Cin); the output has its channel
    dim padded up to a multiple of 128 (padded channels are exact zeros).
    """
    N, H, Wd, Cx = x.shape
    Cout, Cin, k, _ = W.shape
    Ho = (H + 2 * padding - k) // stride + 1
    Wo = (Wd + 2 * padding - k) // stride + 1
    Coutp = _round_up(Cout, 128)

    # Fold BN scale into the conv weight; zero-pad Cin -> Cx and Cout -> Coutp.
    Wf = (W * scale[:, None, None, None]).astype(jnp.float32)
    if Coutp != Cout or Cx != Cin:
        Wf = jnp.pad(Wf, ((0, Coutp - Cout), (0, Cx - Cin), (0, 0), (0, 0)))
    bias_p = bias.astype(jnp.float32)
    if Coutp != Cout:
        bias_p = jnp.pad(bias_p, (0, Coutp - Cout))

    res_flat = None
    if residual is not None:
        assert residual.shape[-1] == Coutp
        res_flat = residual.reshape(N * Ho * Wo, Coutp).astype(jnp.bfloat16)

    xkw_bytes = (H + 2 * padding) * Wo * k * Cx * 2      # bf16, per image
    use_direct = (stride == 1 and Wo % 8 == 0 and (Ho * Wo) % 8 == 0
                  and Cx % 128 == 0
                  and 2 * xkw_bytes <= _VMEM_LIMIT // 3)
    if use_direct:
        out = _direct_conv(x, Wf, bias_p, padding, relu, res_flat, k)
    else:
        patches = _im2col(x.astype(jnp.bfloat16), k, stride, padding)
        a = patches.reshape(N * Ho * Wo, k * k * Cx)
        # weight row index = (kh*k + kw)*Cx + cin  (matches patch ordering)
        bmat = jnp.transpose(Wf, (2, 3, 1, 0)).reshape(k * k * Cx, Coutp)
        out = fused_matmul(a, bmat, bias_p, res_flat, relu)
    return out.reshape(N, Ho, Wo, Coutp)


def ph_conv_weight(key, n, cin, cout, k):
    """PHConv weight = sum_s kron(A[s], F[s]) -> (cout, cin, k, k)."""
    kA, kF = jax.random.split(key)
    A = jax.random.normal(kA, (n, n, n), jnp.float32) * (1.0 / n)
    Fw = jax.random.normal(kF, (n, cout // n, cin // n, k, k), jnp.float32)
    Fw = Fw * (1.0 / jnp.sqrt(float(cin * k * k)))
    W = jnp.einsum('sab,spqhw->apbqhw', A, Fw).reshape(cout, cin, k, k)
    return W


def bn_fold(key, c, eps=1e-5):
    """Eval-mode BatchNorm2d folded into per-channel (scale, bias)."""
    k1, k2, k3, k4 = jax.random.split(key, 4)
    gamma = 1.0 + 0.1 * jax.random.normal(k1, (c,), jnp.float32)
    beta = 0.1 * jax.random.normal(k2, (c,), jnp.float32)
    mean = 0.1 * jax.random.normal(k3, (c,), jnp.float32)
    var = jax.random.uniform(k4, (c,), jnp.float32, 0.5, 1.5)
    scale = gamma / jnp.sqrt(var + eps)
    bias = beta - mean * scale
    return scale, bias


# ----------------------------------------------------------------------------
# PHCResNet (block=BasicBlock, expansion=1) parameters + forward.
# ----------------------------------------------------------------------------
def make_basic_block_params(key, in_planes, planes, stride, n):
    ks = jax.random.split(key, 6)
    p = {
        'stride': stride,
        'W1': ph_conv_weight(ks[0], n, in_planes, planes, 3),
        'W2': ph_conv_weight(ks[1], n, planes, planes, 3),
    }
    p['s1'], p['b1'] = bn_fold(ks[2], planes)
    p['s2'], p['b2'] = bn_fold(ks[3], planes)
    if stride != 1 or in_planes != planes:
        p['Wsc'] = ph_conv_weight(ks[4], n, in_planes, planes, 1)
        p['ssc'], p['bsc'] = bn_fold(ks[5], planes)
    return p


def make_phc_resnet_params(key, num_blocks, channels=4, n=4, num_classes=10):
    params = {}
    key, k_stem, k_bn = jax.random.split(key, 3)
    params['stem_W'] = ph_conv_weight(k_stem, n, channels, 64, 3)
    params['stem_s'], params['stem_b'] = bn_fold(k_bn, 64)

    in_planes = 64
    for li, (planes, nb, stride) in enumerate(
            zip([64, 128, 256, 512], num_blocks, [1, 2, 2, 2]), start=1):
        blocks = []
        strides = [stride] + [1] * (nb - 1)
        for s in strides:
            key, bk = jax.random.split(key)
            blocks.append(make_basic_block_params(bk, in_planes, planes, s, n))
            in_planes = planes  # BasicBlock.expansion == 1
        params[f'layer{li}'] = blocks

    key, kw, kb = jax.random.split(key, 3)
    bound = 1.0 / jnp.sqrt(512.0)
    params['lin_W'] = jax.random.uniform(kw, (num_classes, 512), jnp.float32,
                                         -bound, bound)
    params['lin_b'] = jax.random.uniform(kb, (num_classes,), jnp.float32,
                                         -bound, bound)
    return params


def basic_block_apply(x, p):
    out = conv_bn(x, p['W1'], p['s1'], p['b1'], p['stride'], 1, relu=True)
    if 'Wsc' in p:
        sc = conv_bn(x, p['Wsc'], p['ssc'], p['bsc'], p['stride'], 0, relu=False)
    else:
        sc = x
    # relu(bn2(conv2(out)) + shortcut) — residual add + ReLU fused in-kernel.
    out = conv_bn(out, p['W2'], p['s2'], p['b2'], 1, 1, relu=True, residual=sc)
    return out


def phc_resnet_forward(x_nchw, params):
    # PyTorch NCHW -> NHWC; bf16 activations between layers.
    x = jnp.transpose(x_nchw, (0, 2, 3, 1)).astype(jnp.bfloat16)

    out = conv_bn(x, params['stem_W'], params['stem_s'], params['stem_b'],
                  stride=1, padding=1, relu=True)
    for li in range(1, 5):
        for blk in params[f'layer{li}']:
            out = basic_block_apply(out, blk)

    # out: (N, 2, 2, 512) — GAP + Linear fused in one small f32 Pallas kernel.
    return gap_linear(out, params['lin_W'], params['lin_b'])   # (N, num_classes)


# TODO(synk): BatchNorm is implemented in eval mode (folded running stats);
# training-mode batch statistics are not reproduced.
# TODO(synk): optional paths (add_top_blocks/Bottleneck refiners,
# before_gap_output / gap_output / visualize early returns) are not implemented;
# only the default forward path is.

if __name__ == "__main__":
    key = jax.random.PRNGKey(0)
    k_in, k_par = jax.random.split(key)

    # Small config: BasicBlock, num_blocks=[1,1,1,1], channels=4, n=4, classes=10
    x = jax.random.normal(k_in, (2, 4, 16, 16), jnp.float32)  # NCHW, like PyTorch
    params = make_phc_resnet_params(k_par, num_blocks=[1, 1, 1, 1],
                                    channels=4, n=4, num_classes=10)

    logits = phc_resnet_forward(x, params)
    logits = jax.block_until_ready(logits)
    assert logits.shape == (2, 10)
    assert bool(jnp.all(jnp.isfinite(logits)))
    print("KERNEL_OK")
</pallas_src>

<mosaic_0001>
module attributes {stable_mosaic.version = 11 : i64} {
  func.func @_mm_kernel(%arg0: i32, %arg1: i32, %arg2: i32, %arg3: memref<256x36xbf16, #tpu.memory_space<vmem>>, %arg4: memref<36x128xbf16, #tpu.memory_space<vmem>>, %arg5: memref<1x128xf32, #tpu.memory_space<vmem>>, %arg6: memref<256x128xbf16, #tpu.memory_space<vmem>>, %arg7: memref<256x128xf32, #tpu.memory_space<vmem>>) attributes {dimension_semantics = [#tpu.dimension_semantics<parallel>, #tpu.dimension_semantics<parallel>, #tpu.dimension_semantics<arbitrary>], iteration_bounds = array<i64: 2, 1, 1>, scalar_prefetch = 0 : i64, scratch_operands = 1 : i64, tpu.core_type = #tpu.core_type<tc>, window_params = [{transform_indices = @transform_0, window_bounds = array<i64: 256, 36>}, {transform_indices = @transform_1, window_bounds = array<i64: 36, 128>}, {transform_indices = @transform_2, window_bounds = array<i64: 1, 128>}, {transform_indices = @transform_3, window_bounds = array<i64: 256, 128>}]} {
    %c0_i32 = arith.constant 0 : i32
    %0 = arith.cmpi eq, %arg2, %c0_i32 : i32
    %1 = arith.extui %0 : i1 to i32
    %c0_i32_0 = arith.constant 0 : i32
    %2 = arith.cmpi ne, %1, %c0_i32_0 : i32
    scf.if %2 {
      %cst_10 = arith.constant 0.000000e+00 : f32
      %12 = vector.broadcast %cst_10 : f32 to vector<256x128xf32>
      %c0_11 = arith.constant 0 : index
      %c0_12 = arith.constant 0 : index
      %13 = vector.load %arg7[%c0_11, %c0_12] : memref<256x128xf32, #tpu.memory_space<vmem>>, vector<256x128xf32>
      tpu.vector_store %arg7[%c0_11, %c0_12], %12 {strides = array<i32>} : memref<256x128xf32, #tpu.memory_space<vmem>>, vector<256x128xf32>,
    } else {
    }
    %c0 = arith.constant 0 : index
    %c0_1 = arith.constant 0 : index
    %3 = vector.load %arg7[%c0, %c0_1] : memref<256x128xf32, #tpu.memory_space<vmem>>, vector<256x128xf32>
    %c0_2 = arith.constant 0 : index
    %c0_3 = arith.constant 0 : index
    %4 = vector.load %arg3[%c0_2, %c0_3] : memref<256x36xbf16, #tpu.memory_space<vmem>>, vector<256x36xbf16>
    %c0_4 = arith.constant 0 : index
    %c0_5 = arith.constant 0 : index
    %5 = vector.load %arg4[%c0_4, %c0_5] : memref<36x128xbf16, #tpu.memory_space<vmem>>, vector<36x128xbf16>
    %cst = arith.constant dense<0.000000e+00> : vector<256x128xf32>
    %6 = tpu.matmul %4, %5, %cst {dimension_numbers = #tpu.dot_dimension_numbers<[1], [0], [0], [1], [0, 0, 1, 1], [], []>} : vector<256x36xbf16>, vector<36x128xbf16>, vector<256x128xf32> -> vector<256x128xf32>
    %7 = arith.addf %3, %6 : vector<256x128xf32>
    %c0_6 = arith.constant 0 : index
    %c0_7 = arith.constant 0 : index
    %8 = vector.load %arg7[%c0_6, %c0_7] : memref<256x128xf32, #tpu.memory_space<vmem>>, vector<256x128xf32>
    tpu.vector_store %arg7[%c0_6, %c0_7], %7 {strides = array<i32>} : memref<256x128xf32, #tpu.memory_space<vmem>>, vector<256x128xf32>,
    %c0_i32_8 = arith.constant 0 : i32
    %9 = arith.cmpi eq, %arg2, %c0_i32_8 : i32
    %10 = arith.extui %9 : i1 to i32
    %c0_i32_9 = arith.constant 0 : i32
    %11 = arith.cmpi ne, %10, %c0_i32_9 : i32
    scf.if %11 {
      %c0_10 = arith.constant 0 : index
      %c0_11 = arith.constant 0 : index
      %12 = vector.load %arg7[%c0_10, %c0_11] : memref<256x128xf32, #tpu.memory_space<vmem>>, vector<256x128xf32>
      %c0_12 = arith.constant 0 : index
      %c0_13 = arith.constant 0 : index
      %13 = vector.load %arg5[%c0_12, %c0_13] : memref<1x128xf32, #tpu.memory_space<vmem>>, vector<1x128xf32>
      %14 = vector.broadcast %13 : vector<1x128xf32> to vector<256x128xf32>
      %15 = arith.addf %12, %14 : vector<256x128xf32>
      %cst_14 = arith.constant 0.000000e+00 : f32
      %16 = vector.broadcast %cst_14 : f32 to vector<256x128xf32>
      %17 = arith.maximumf %15, %16 : vector<256x128xf32>
      %18 = arith.truncf %17 : vector<256x128xf32> to vector<256x128xbf16>
      %c0_15 = arith.constant 0 : index
      %c0_16 = arith.constant 0 : index
      %19 = vector.load %arg6[%c0_15, %c0_16] : memref<256x128xbf16, #tpu.memory_space<vmem>>, vector<256x128xbf16>
      tpu.vector_store %arg6[%c0_15, %c0_16], %18 {strides = array<i32>} : memref<256x128xbf16, #tpu.memory_space<vmem>>, vector<256x128xbf16>,
    } else {
    }
    return
  }
  func.func @transform_0(%arg0: i32, %arg1: i32, %arg2: i32) -> (i32, i32) {
    %c0_i32 = arith.constant 0 : i32
    return %arg0, %arg2 : i32, i32
  }
  func.func @transform_1(%arg0: i32, %arg1: i32, %arg2: i32) -> (i32, i32) {
    %c0_i32 = arith.constant 0 : i32
    return %arg2, %arg1 : i32, i32
  }
  func.func @transform_2(%arg0: i32, %arg1: i32, %arg2: i32) -> (i32, i32) {
    %c0_i32 = arith.constant 0 : i32
    %c0_i32_0 = arith.constant 0 : i32
    return %c0_i32, %arg1 : i32, i32
  }
  func.func @transform_3(%arg0: i32, %arg1: i32, %arg2: i32) -> (i32, i32) {
    %c0_i32 = arith.constant 0 : i32
    return %arg0, %arg1 : i32, i32
  }
}

</mosaic_0001>

<llo_original>
// kernel: tpu_custom_call.1
$region0: #{tpu_custom_call.1}
  #allocation0 [shape = 'u32[]', space=smem, size = 0x4, offset = 0x4, fixed_abs, tag = 'smem constant byte address 0x4 - core index']
  #allocation1 [shape = 'u32[144,128]{1,0:T(1,128)}', space=vmem, size = 0x12000, scoped, tag = 'internal scratch']
  #allocation2 [shape = 'f32[256,128]{1,0:T(8,128)}', space=vmem, size = 0x20000, scoped, tag = 'scratch operand']
  %s0 = inlined_call_operand.vmem [shape: bf16[512,36], index: 0, kind: input, shape index: {}]
  %s1 = inlined_call_operand.vmem [shape: bf16[36,128], index: 1, kind: input, shape index: {}]
  %s2 = inlined_call_operand.vmem [shape: f32[1,128], index: 2, kind: input, shape index: {}]
  %s3 = inlined_call_operand.hbm [shape: bf16[512,128], index: 3, kind: output, shape index: {}]
  %s4 = sld [smem:[#allocation0]]
  $region53: #{tpu_custom_call.1} parent=0
    _
  %s6 = ssub.s32 1, %s4
  %s7 = scalar_select 0, %s6, %s4
  $region1: #{tpu_custom_call.1} parent=0
    #allocation3 [shape = 'u8[131072]{0}', space=vmem, size = 0x20000, scoped, tag = 'output window, operand 0']
    #allocation4 [shape = 's32[2]{0}', space=sflag, size = 0x8, scoped, tag = 'scoped memory for tpu_custom_call.1']
    %8 = vsyncpa [#allocation4], 0
    %s9 = scalar_lea.sflag [#allocation4], 1
    %10 = vsyncpa %s9, 0
    loop: start=0, step=1, limit=4
    $region2: #{tpu_custom_call.1} parent=1 // loop_pre_header
      _
    $region3: #{tpu_custom_call.1} parent=1 // loop_header
      %s12 = sphi 0, %s16
      %p13 = scmp.ge.s32.totalorder %s12, 4
      %s19 = sphi 0, %s38
      %s20 = sphi 0, %s34
      %s21 = sphi 0, %s30
      %s22 = sphi 0, %s19
      %s23 = sphi 0, %s20
      %s24 = sphi 0, %s21
      %s25 = sphi 0, %s22
      %s26 = sphi 0, %s23
      %s27 = sphi 0, %s24
      %s43 = sphi 0, %s45
      %s46 = sphi 0, %s43
      %s47 = sphi 0, %s46
      %s63 = sphi 0, %s47
      %s71 = sphi 0, %s73
      %s74 = sphi 0, %s71
      %s75 = sphi 0, %s74
      %s91 = sphi 0, %s75
      %s97 = sphi 0, %s99
      %s100 = sphi 0, %s97
      %s101 = sphi 0, %s100
      %s117 = sphi 0, %s101
      %s125 = sphi 0, %s127
      %s128 = sphi 0, %s125
      %s129 = sphi 0, %s128
      %s145 = sphi 0, %s129
    $region4: #{tpu_custom_call.1} parent=1 // loop_header_branch
      %15 = sbr.rel (%p13) target = $region8
    $region5: #{tpu_custom_call.1} parent=1 // loop_body
      %s17 = ssub.s32 %s12, 1
      %s18 = ssub.s32 %s12, 2
      %s28 = sadd.s32 1, %s21
      %p29 = scmp.ge.s32.totalorder %s28, 1
      %s30 = scalar_select %p29, 0, %s28
      %s31 = sadd.s32 1, %s20
      %s32 = scalar_select %p29, %s31, %s20
      %p33 = scmp.ge.s32.totalorder %s32, 1
      %s34 = scalar_select %p33, 0, %s32
      %s35 = sadd.s32 1, %s19
      %s36 = scalar_select %p33, %s35, %s19
      %p37 = scmp.ge.s32.totalorder %s36, 2
      %s38 = scalar_select %p37, 0, %s36
      %s39 = ssub.s32 %s19, %s38
      %s40 = ssub.s32 %s21, %s30
      %s41 = sor.u32 %s39, %s40
      %p42 = scmp.eq.s32.totalorder %s41, 0
      %s44 = sadd.s32 %s43, 1
      %s45 = scalar_select %p42, %s43, %s44
      %p48 = pneg %p42
      %p49 = scmp.eq.s32.totalorder %s12, 1
      %p50 = por %p48, %p49
      %p51 = scmp.ne.s32.totalorder %s43, %s46
      %p52 = scmp.eq.s32.totalorder %s12, 0
      %p53 = por %p51, %p52
      %p54 = scmp.ne.s32.totalorder %s43, %s46
      %p55 = scmp.eq.s32.totalorder %s17, 1
      %p56 = por %p54, %p55
      %p57 = scmp.ne.s32.totalorder %s46, %s47
      %p58 = scmp.eq.s32.totalorder %s17, 0
      %p59 = por %p57, %p58
      %p60 = scmp.ne.s32.totalorder %s46, %s47
      %p61 = scmp.eq.s32.totalorder %s18, 1
      %p62 = por %p60, %p61
      %p64 = scmp.ne.s32.totalorder %s47, %s63
      %p65 = scmp.eq.s32.totalorder %s18, 0
      %p66 = por %p64, %p65
      %s67 = ssub.s32 %s21, %s30
      %s68 = ssub.s32 %s20, %s34
      %s69 = sor.u32 %s67, %s68
      %p70 = scmp.eq.s32.totalorder %s69, 0
      %s72 = sadd.s32 %s71, 1
      %s73 = scalar_select %p70, %s71, %s72
      %p76 = pneg %p70
      %p77 = scmp.eq.s32.totalorder %s12, 1
      %p78 = por %p76, %p77
      %p79 = scmp.ne.s32.totalorder %s71, %s74
      %p80 = scmp.eq.s32.totalorder %s12, 0
      %p81 = por %p79, %p80
      %p82 = scmp.ne.s32.totalorder %s71, %s74
      %p83 = scmp.eq.s32.totalorder %s17, 1
      %p84 = por %p82, %p83
      %p85 = scmp.ne.s32.totalorder %s74, %s75
      %p86 = scmp.eq.s32.totalorder %s17, 0
      %p87 = por %p85, %p86
      %p88 = scmp.ne.s32.totalorder %s74, %s75
      %p89 = scmp.eq.s32.totalorder %s18, 1
      %p90 = por %p88, %p89
      %p92 = scmp.ne.s32.totalorder %s75, %s91
      %p93 = scmp.eq.s32.totalorder %s18, 0
      %p94 = por %p92, %p93
      %s95 = ssub.s32 %s20, %s34
      %p96 = scmp.eq.s32.totalorder %s95, 0
      %s98 = sadd.s32 %s97, 1
      %s99 = scalar_select %p96, %s97, %s98
      %p102 = pneg %p96
      %p103 = scmp.eq.s32.totalorder %s12, 1
      %p104 = por %p102, %p103
      %p105 = scmp.ne.s32.totalorder %s97, %s100
      %p106 = scmp.eq.s32.totalorder %s12, 0
      %p107 = por %p105, %p106
      %p108 = scmp.ne.s32.totalorder %s97, %s100
      %p109 = scmp.eq.s32.totalorder %s17, 1
      %p110 = por %p108, %p109
      %p111 = scmp.ne.s32.totalorder %s100, %s101
      %p112 = scmp.eq.s32.totalorder %s17, 0
      %p113 = por %p111, %p112
      %p114 = scmp.ne.s32.totalorder %s100, %s101
      %p115 = scmp.eq.s32.totalorder %s18, 1
      %p116 = por %p114, %p115
      %p118 = scmp.ne.s32.totalorder %s101, %s117
      %p119 = scmp.eq.s32.totalorder %s18, 0
      %p120 = por %p118, %p119
      %s121 = ssub.s32 %s19, %s38
      %s122 = ssub.s32 %s20, %s34
      %s123 = sor.u32 %s121, %s122
      %p124 = scmp.eq.s32.totalorder %s123, 0
      %s126 = sadd.s32 %s125, 1
      %s127 = scalar_select %p124, %s125, %s126
      %p130 = pneg %p124
      %p131 = scmp.eq.s32.totalorder %s12, 1
      %p132 = por %p130, %p131
      %p133 = scmp.ne.s32.totalorder %s125, %s128
      %p134 = scmp.eq.s32.totalorder %s12, 0
      %p135 = por %p133, %p134
      %p136 = scmp.ne.s32.totalorder %s125, %s128
      %p137 = scmp.eq.s32.totalorder %s17, 1
      %p138 = por %p136, %p137
      %p139 = scmp.ne.s32.totalorder %s128, %s129
      %p140 = scmp.eq.s32.totalorder %s17, 0
      %p141 = por %p139, %p140
      %p142 = scmp.ne.s32.totalorder %s128, %s129
      %p143 = scmp.eq.s32.totalorder %s18, 1
      %p144 = por %p142, %p143
      %p146 = scmp.ne.s32.totalorder %s129, %s145
      %p147 = scmp.eq.s32.totalorder %s18, 0
      %p148 = por %p146, %p147
      %p149 = scmp.le.s32.totalorder 1, %s12
      %p150 = scmp.lt.s32.totalorder %s12, 3
      %p151 = pnand %p149, %p150
      %p152 = pneg %p151
      // Predicated region
      $region9: #{tpu_custom_call.1} parent=5 // pred_check
        _
      $region10: #{tpu_custom_call.1} parent=5 // pred_check_branch
        %154 = sbr.rel (%p151) target = $region12
      $region11: #{tpu_custom_call.1} parent=5 // pred_region
        %s155 = ssub.s32 %s12, 1
        // Predicated region
        $region13: #{tpu_custom_call.1} parent=11 // pred_check
          %p156 = pneg %p87
        $region14: #{tpu_custom_call.1} parent=11 // pred_check_branch
          %158 = sbr.rel (%p156) target = $region16
        $region15: #{tpu_custom_call.1} parent=11 // pred_region
          %s159 = smul.u32 5, %s24
          %p160 = scmp.lt.s32.totalorder %s159, 4
          %s161 = scalar_select %p160, %s159, 4
          %p162 = scmp.lt.s32.totalorder %s23, 0
          %s163 = scalar_select %p162, %s23, 0
          %s164 = sadd.s32 %s163, %s161
          %s165 = smul.addr %s164, 4
          %s166 = scalar_lea.vmem %s1, %s165
          %s167 = smul.u32 5, %s24
        $region16: #{tpu_custom_call.1} parent=11 // pred_fallthru
          _
        // Predicated region
        $region17: #{tpu_custom_call.1} parent=11 // pred_check
          %p168 = pneg %p113
        $region18: #{tpu_custom_call.1} parent=11 // pred_check_branch
          %170 = sbr.rel (%p168) target = $region20
        $region19: #{tpu_custom_call.1} parent=11 // pred_region
          %p171 = scmp.lt.s32.totalorder %s23, 0
          %s172 = scalar_select %p171, %s23, 0
          %s173 = scalar_lea.vmem %s2, %s172
        $region20: #{tpu_custom_call.1} parent=11 // pred_fallthru
          _
      $region12: #{tpu_custom_call.1} parent=5 // pred_fallthru
        _
      %p174 = scmp.lt.s32.totalorder %s12, 2
      // Predicated region
      $region21: #{tpu_custom_call.1} parent=5 // pred_check
        %p175 = pneg %p174
      $region22: #{tpu_custom_call.1} parent=5 // pred_check_branch
        %177 = sbr.rel (%p175) target = $region24
      $region23: #{tpu_custom_call.1} parent=5 // pred_region
        // Predicated region
        $region25: #{tpu_custom_call.1} parent=23 // pred_check
          %p178 = pneg %p53
        $region26: #{tpu_custom_call.1} parent=23 // pred_check_branch
          %180 = sbr.rel (%p178) target = $region28
        $region27: #{tpu_custom_call.1} parent=23 // pred_region
          %s181 = smul.u32 32, %s19
          %p182 = scmp.lt.s32.totalorder %s181, 63
          %s183 = scalar_select %p182, %s181, 63
          %p184 = scmp.lt.s32.totalorder %s21, 0
          %s185 = scalar_select %p184, %s21, 0
          %s186 = sadd.s32 %s185, %s183
          %s187 = smul.addr %s186, 4
          %s188 = scalar_lea.vmem %s0, %s187
          %s189 = smul.u32 32, %s19
        $region28: #{tpu_custom_call.1} parent=23 // pred_fallthru
          _
      $region24: #{tpu_custom_call.1} parent=5 // pred_fallthru
        _
      %p190 = scmp.le.s32.totalorder 1, %s12
      %p191 = scmp.lt.s32.totalorder %s12, 3
      %p192 = pnand %p190, %p191
      %p193 = pneg %p192
      // Predicated region
      $region29: #{tpu_custom_call.1} parent=5 // pred_check
        _
      $region30: #{tpu_custom_call.1} parent=5 // pred_check_branch
        %195 = sbr.rel (%p192) target = $region32
      $region31: #{tpu_custom_call.1} parent=5 // pred_region
        %s196 = ssub.s32 %s12, 1
        %s197 = smul.u32 32, %s22
        %p198 = scmp.lt.s32.totalorder %s197, 63
        %s199 = scalar_select %p198, %s197, 63
        %p200 = scmp.lt.s32.totalorder %s24, 0
        %s201 = scalar_select %p200, %s24, 0
        %s202 = sadd.s32 %s201, %s199
        %s203 = smul.addr %s202, 4
        %s204 = scalar_lea.vmem %s0, %s203
        %p205 = pneg %p59
        %p206 = pneg %p56
        %s207 = smul.u32 5, %s24
        %p208 = scmp.lt.s32.totalorder %s207, 4
        %s209 = scalar_select %p208, %s207, 4
        %p210 = scmp.lt.s32.totalorder %s23, 0
        %s211 = scalar_select %p210, %s23, 0
        %s212 = sadd.s32 %s211, %s209
        %s213 = smul.addr %s212, 4
        %s214 = scalar_lea.vmem %s1, %s213
        %p215 = pneg %p87
        %p216 = pneg %p84
        %p217 = scmp.lt.s32.totalorder %s23, 0
        %s218 = scalar_select %p217, %s23, 0
        %s219 = scalar_lea.vmem %s2, %s218
        %p220 = pneg %p113
        %p221 = pneg %p110
        %p222 = pneg %p141
        %p223 = pneg %p138
        %s224 = sand.u32 %s128, 1
        %s225 = scalar_lea.sflag [#allocation4], %s224
        %s226 = sand.u32 %s128, 1
        %s227 = smul.addr %s226, 128
        %s228 = scalar_lea.vmem [#allocation3], %s227
        %s229 = smul.u32 32, %s22
        %p230 = scmp.lt.s32.totalorder %s229, 63
        %s231 = scalar_select %p230, %s229, 63
        %p232 = scmp.lt.s32.totalorder %s24, 0
        %s233 = scalar_select %p232, %s24, 0
        %s234 = sadd.s32 %s233, %s231
        %s235 = smul.addr %s234, 4
        %s236 = scalar_lea.vmem %s0, %s235
        %s237 = smul.u32 32, %s22
        %s238 = smul.u32 5, %s24
        %p239 = scmp.lt.s32.totalorder %s238, 4
        %s240 = scalar_select %p239, %s238, 4
        %p241 = scmp.lt.s32.totalorder %s23, 0
        %s242 = scalar_select %p241, %s23, 0
        %s243 = sadd.s32 %s242, %s240
        %s244 = smul.addr %s243, 4
        %s245 = scalar_lea.vmem %s1, %s244
        %s246 = smul.u32 5, %s24
        %p247 = scmp.lt.s32.totalorder %s23, 0
        %s248 = scalar_select %p247, %s23, 0
        %s249 = scalar_lea.vmem %s2, %s248
        %s250 = smul.u32 32, %s22
        %p252 = scmp.eq.s32.totalorder %s24, 0
        // Predicated region
        $region33: #{tpu_custom_call.1} parent=31 // pred_check
          %p253 = pneg %p252
        $region34: #{tpu_custom_call.1} parent=31 // pred_check_branch
          %255 = sbr.rel (%p253) target = $region36
        $region35: #{tpu_custom_call.1} parent=31 // pred_region
          %256 = vst [vmem:[#allocation2] sm:$0xff] 0.0
          %257 = vst [vmem:[#allocation2 + $0x8] sm:$0xff] 0.0
          %258 = vst [vmem:[#allocation2 + $0x10] sm:$0xff] 0.0
          %259 = vst [vmem:[#allocation2 + $0x18] sm:$0xff] 0.0
          %260 = vst [vmem:[#allocation2 + $0x20] sm:$0xff] 0.0
          %261 = vst [vmem:[#allocation2 + $0x28] sm:$0xff] 0.0
          %262 = vst [vmem:[#allocation2 + $0x30] sm:$0xff] 0.0
          %263 = vst [vmem:[#allocation2 + $0x38] sm:$0xff] 0.0
          %264 = vst [vmem:[#allocation2 + $0x40] sm:$0xff] 0.0
          %265 = vst [vmem:[#allocation2 + $0x48] sm:$0xff] 0.0
          %266 = vst [vmem:[#allocation2 + $0x50] sm:$0xff] 0.0
          %267 = vst [vmem:[#allocation2 + $0x58] sm:$0xff] 0.0
          %268 = vst [vmem:[#allocation2 + $0x60] sm:$0xff] 0.0
          %269 = vst [vmem:[#allocation2 + $0x68] sm:$0xff] 0.0
          %270 = vst [vmem:[#allocation2 + $0x70] sm:$0xff] 0.0
          %271 = vst [vmem:[#allocation2 + $0x78] sm:$0xff] 0.0
          %272 = vst [vmem:[#allocation2 + $0x80] sm:$0xff] 0.0
          %273 = vst [vmem:[#allocation2 + $0x88] sm:$0xff] 0.0
          %274 = vst [vmem:[#allocation2 + $0x90] sm:$0xff] 0.0
          %275 = vst [vmem:[#allocation2 + $0x98] sm:$0xff] 0.0
          %276 = vst [vmem:[#allocation2 + $0xa0] sm:$0xff] 0.0
          %277 = vst [vmem:[#allocation2 + $0xa8] sm:$0xff] 0.0
          %278 = vst [vmem:[#allocation2 + $0xb0] sm:$0xff] 0.0
          %279 = vst [vmem:[#allocation2 + $0xb8] sm:$0xff] 0.0
          %280 = vst [vmem:[#allocation2 + $0xc0] sm:$0xff] 0.0
          %281 = vst [vmem:[#allocation2 + $0xc8] sm:$0xff] 0.0
          %282 = vst [vmem:[#allocation2 + $0xd0] sm:$0xff] 0.0
          %283 = vst [vmem:[#allocation2 + $0xd8] sm:$0xff] 0.0
          %284 = vst [vmem:[#allocation2 + $0xe0] sm:$0xff] 0.0
          %285 = vst [vmem:[#allocation2 + $0xe8] sm:$0xff] 0.0
          %286 = vst [vmem:[#allocation2 + $0xf0] sm:$0xff] 0.0
          %287 = vst [vmem:[#allocation2 + $0xf8] sm:$0xff] 0.0
        $region36: #{tpu_custom_call.1} parent=31 // pred_fallthru
          _
        %v288 = vld [vmem:[#allocation2] sm:$0xff]
        %v289 = vld [vmem:[#allocation2 + $0x8] sm:$0xff]
        %v290 = vld [vmem:[#allocation2 + $0x10] sm:$0xff]
        %v291 = vld [vmem:[#allocation2 + $0x18] sm:$0xff]
        %v292 = vld [vmem:[#allocation2 + $0x20] sm:$0xff]
        %v293 = vld [vmem:[#allocation2 + $0x28] sm:$0xff]
        %v294 = vld [vmem:[#allocation2 + $0x30] sm:$0xff]
        %v295 = vld [vmem:[#allocation2 + $0x38] sm:$0xff]
        %v296 = vld [vmem:[#allocation2 + $0x40] sm:$0xff]
        %v297 = vld [vmem:[#allocation2 + $0x48] sm:$0xff]
        %v298 = vld [vmem:[#allocation2 + $0x50] sm:$0xff]
        %v299 = vld [vmem:[#allocation2 + $0x58] sm:$0xff]
        %v300 = vld [vmem:[#allocation2 + $0x60] sm:$0xff]
        %v301 = vld [vmem:[#allocation2 + $0x68] sm:$0xff]
        %v302 = vld [vmem:[#allocation2 + $0x70] sm:$0xff]
        %v303 = vld [vmem:[#allocation2 + $0x78] sm:$0xff]
        %v304 = vld [vmem:[#allocation2 + $0x80] sm:$0xff]
        %v305 = vld [vmem:[#allocation2 + $0x88] sm:$0xff]
        %v306 = vld [vmem:[#allocation2 + $0x90] sm:$0xff]
        %v307 = vld [vmem:[#allocation2 + $0x98] sm:$0xff]
        %v308 = vld [vmem:[#allocation2 + $0xa0] sm:$0xff]
        %v309 = vld [vmem:[#allocation2 + $0xa8] sm:$0xff]
        %v310 = vld [vmem:[#allocation2 + $0xb0] sm:$0xff]
        %v311 = vld [vmem:[#allocation2 + $0xb8] sm:$0xff]
        %v312 = vld [vmem:[#allocation2 + $0xc0] sm:$0xff]
        %v313 = vld [vmem:[#allocation2 + $0xc8] sm:$0xff]
        %v314 = vld [vmem:[#allocation2 + $0xd0] sm:$0xff]
        %v315 = vld [vmem:[#allocation2 + $0xd8] sm:$0xff]
        %v316 = vld [vmem:[#allocation2 + $0xe0] sm:$0xff]
        %v317 = vld [vmem:[#allocation2 + $0xe8] sm:$0xff]
        %v318 = vld [vmem:[#allocation2 + $0xf0] sm:$0xff]
        %v319 = vld [vmem:[#allocation2 + $0xf8] sm:$0xff]
        %v320 = vld [vmem:[%s236] sm:$0xf]
        %v321 = vld [vmem:[%s236 + $0x4] sm:$0xf]
        %v322 = vld [vmem:[%s236 + $0x8] sm:$0xf]
        %v323 = vld [vmem:[%s236 + $0xc] sm:$0xf]
        %v324 = vld [vmem:[%s236 + $0x10] sm:$0xf]
        %v325 = vld [vmem:[%s236 + $0x14] sm:$0xf]
        %v326 = vld [vmem:[%s236 + $0x18] sm:$0xf]
        %v327 = vld [vmem:[%s236 + $0x1c] sm:$0xf]
        %v328 = vld [vmem:[%s236 + $0x20] sm:$0xf]
        %v329 = vld [vmem:[%s236 + $0x24] sm:$0xf]
        %v330 = vld [vmem:[%s236 + $0x28] sm:$0xf]
        %v331 = vld [vmem:[%s236 + $0x2c] sm:$0xf]
        %v332 = vld [vmem:[%s236 + $0x30] sm:$0xf]
        %v333 = vld [vmem:[%s236 + $0x34] sm:$0xf]
        %v334 = vld [vmem:[%s236 + $0x38] sm:$0xf]
        %v335 = vld [vmem:[%s236 + $0x3c] sm:$0xf]
        %v336 = vld [vmem:[%s236 + $0x40] sm:$0xf]
        %v337 = vld [vmem:[%s236 + $0x44] sm:$0xf]
        %v338 = vld [vmem:[%s236 + $0x48] sm:$0xf]
        %v339 = vld [vmem:[%s236 + $0x4c] sm:$0xf]
        %v340 = vld [vmem:[%s236 + $0x50] sm:$0xf]
        %v341 = vld [vmem:[%s236 + $0x54] sm:$0xf]
        %v342 = vld [vmem:[%s236 + $0x58] sm:$0xf]
        %v343 = vld [vmem:[%s236 + $0x5c] sm:$0xf]
        %v344 = vld [vmem:[%s236 + $0x60] sm:$0xf]
        %v345 = vld [vmem:[%s236 + $0x64] sm:$0xf]
        %v346 = vld [vmem:[%s236 + $0x68] sm:$0xf]
        %v347 = vld [vmem:[%s236 + $0x6c] sm:$0xf]
        %v348 = vld [vmem:[%s236 + $0x70] sm:$0xf]
        %v349 = vld [vmem:[%s236 + $0x74] sm:$0xf]
        %v350 = vld [vmem:[%s236 + $0x78] sm:$0xf]
        %v351 = vld [vmem:[%s236 + $0x7c] sm:$0xf]
        %v352 = vld [vmem:[%s245] sm:$0xf]
        %v353 = vld [vmem:[%s245 + $0x4] sm:$0xf]
        %v354 = vld [vmem:[%s245 + $0x8] sm:$0xf]
        %v355 = vld [vmem:[%s245 + $0xc] sm:$0xf]
        %v356 = vld [vmem:[%s245 + $0x10] sm:$0x3]
        %v389 = vunpack.c.l.b16 %v320
        %v390 = vunpack.c.l.b16 %v321
        %v391 = vunpack.c.l.b16 %v322
        %v392 = vunpack.c.l.b16 %v323
        %v393 = vunpack.c.l.b16 %v324
        %v394 = vunpack.c.l.b16 %v325
        %v395 = vunpack.c.l.b16 %v326
        %v396 = vunpack.c.l.b16 %v327
        %v397 = vunpack.c.l.b16 %v328
        %v398 = vunpack.c.l.b16 %v329
        %v399 = vunpack.c.l.b16 %v330
        %v400 = vunpack.c.l.b16 %v331
        %v401 = vunpack.c.l.b16 %v332
        %v402 = vunpack.c.l.b16 %v333
        %v403 = vunpack.c.l.b16 %v334
        %v404 = vunpack.c.l.b16 %v335
        %v405 = vunpack.c.l.b16 %v336
        %v406 = vunpack.c.l.b16 %v337
        %v407 = vunpack.c.l.b16 %v338
        %v408 = vunpack.c.l.b16 %v339
        %v409 = vunpack.c.l.b16 %v340
        %v410 = vunpack.c.l.b16 %v341
        %v411 = vunpack.c.l.b16 %v342
        %v412 = vunpack.c.l.b16 %v343
        %v413 = vunpack.c.l.b16 %v344
        %v414 = vunpack.c.l.b16 %v345
        %v415 = vunpack.c.l.b16 %v346
        %v416 = vunpack.c.l.b16 %v347
        %v417 = vunpack.c.l.b16 %v348
        %v418 = vunpack.c.l.b16 %v349
        %v419 = vunpack.c.l.b16 %v350
        %v420 = vunpack.c.l.b16 %v351
        %v421 = vpack.c.b16 %v390, %v389
        %v422 = vpack.c.b16 %v392, %v391
        %v423 = vpack.c.b16 %v394, %v393
        %v424 = vpack.c.b16 %v396, %v395
        %v425 = vpack.c.b16 %v398, %v397
        %v426 = vpack.c.b16 %v400, %v399
        %v427 = vpack.c.b16 %v402, %v401
        %v428 = vpack.c.b16 %v404, %v403
        %v429 = vpack.c.b16 %v406, %v405
        %v430 = vpack.c.b16 %v408, %v407
        %v431 = vpack.c.b16 %v410, %v409
        %v432 = vpack.c.b16 %v412, %v411
        %v433 = vpack.c.b16 %v414, %v413
        %v434 = vpack.c.b16 %v416, %v415
        %v435 = vpack.c.b16 %v418, %v417
        %v436 = vpack.c.b16 %v420, %v419
        %v442 = vunpack.c.l.b16 %v352
        %v443 = vunpack.c.l.b16 %v353
        %v444 = vunpack.c.l.b16 %v354
        %v445 = vunpack.c.l.b16 %v355
        %v446 = vunpack.c.l.b16 %v356
        %v447 = vpack.c.b16 %v443, %v442
        %v448 = vpack.c.b16 %v445, %v444
        %v449 = vpack.c.b16 %v446, %v446
        %vm452 = vcmask 293888
        %v454 = vsel %vm452, %v421, 0
        %v457 = vsel %vm452, %v422, 0
        %v460 = vsel %vm452, %v423, 0
        %v463 = vsel %vm452, %v424, 0
        %v466 = vsel %vm452, %v425, 0
        %v469 = vsel %vm452, %v426, 0
        %v472 = vsel %vm452, %v427, 0
        %v475 = vsel %vm452, %v428, 0
        %v478 = vsel %vm452, %v429, 0
        %v481 = vsel %vm452, %v430, 0
        %v484 = vsel %vm452, %v431, 0
        %v487 = vsel %vm452, %v432, 0
        %v490 = vsel %vm452, %v433, 0
        %v493 = vsel %vm452, %v434, 0
        %v496 = vsel %vm452, %v435, 0
        %v499 = vsel %vm452, %v436, 0
        %vm501 = vcmask 1041408
        %v503 = vsel %vm501, %v449, 0
        %505 = vmatprep.subr.bf16.mxu0 0
        %506 = vmatpush1.bf16.msra.mxu0 0
        %507 = vmatprep.subr.bf16.mxu0 0
        %508 = vmatpush1.bf16.msra.mxu0 0
        %509 = vmatprep.subr.bf16.mxu0 0
        %510 = vmatpush1.bf16.msra.mxu0 0
        %511 = vmatprep.subr.bf16.mxu0 0
        %512 = vmatpush1.bf16.msra.mxu0 0
        %513 = vmatprep.subr.bf16.mxu0 0
        %514 = vmatpush1.bf16.msra.mxu0 0
        %515 = vmatprep.subr.bf16.mxu0 0
        %516 = vmatpush1.bf16.msra.mxu0 %v503
        %517 = vmatprep.subr.bf16.mxu0 0
        %518 = vmatpush1.bf16.msra.mxu0 %v448
        %519 = vmatprep.subr.bf16.mxu0 0
        %520 = vmatpush1.bf16.msra.mxu0 %v447
        %521 = vmatprep.subr.bf16.mxu0 0
        %522 = vmatpush2.bf16.msra.mxu0 0
        %523 = vmatprep.subr.bf16.mxu0 0
        %524 = vmatpush2.bf16.msra.mxu0 0
        %525 = vmatprep.subr.bf16.mxu0 0
        %526 = vmatpush2.bf16.msra.mxu0 0
        %527 = vmatprep.subr.bf16.mxu0 0
        %528 = vmatpush2.bf16.msra.mxu0 0
        %529 = vmatprep.subr.bf16.mxu0 0
        %530 = vmatpush2.bf16.msra.mxu0 0
        %531 = vmatprep.subr.bf16.mxu0 0
        %532 = vmatpush2.bf16.msra.mxu0 0
        %533 = vmatprep.subr.bf16.mxu0 0
        %534 = vmatpush2.bf16.msra.mxu0 0
        %535 = vmatprep.subr.bf16.mxu0 0
        %536 = vmatpush2.bf16.msra.mxu0 0
        %537 = vmatprep.mubr.bf16.mxu0 0
        %538 = vmatmul.mubr.bf16.gmra.mxu0 %v454
        %v539 = vpop.f32.mrf.mxu0
        %v540 = vadd.f32 0.0, %v539
        %v541 = vpop.f32.mrf.mxu0
        %v542 = vpop.f32.mrf.mxu0
        %v543 = vadd.f32 0.0, %v542
        %v544 = vpop.f32.mrf.mxu0
        %545 = vmatprep.mubr.bf16.mxu0 0
        %546 = vmatmul.mubr.bf16.gmra.mxu0 %v457
        %v547 = vpop.f32.mrf.mxu0
        %v548 = vadd.f32 0.0, %v547
        %v549 = vpop.f32.mrf.mxu0
        %v550 = vpop.f32.mrf.mxu0
        %v551 = vadd.f32 0.0, %v550
        %v552 = vpop.f32.mrf.mxu0
        %553 = vmatprep.mubr.bf16.mxu0 0
        %554 = vmatmul.mubr.bf16.gmra.mxu0 %v460
        %v555 = vpop.f32.mrf.mxu0
        %v556 = vadd.f32 0.0, %v555
        %v557 = vpop.f32.mrf.mxu0
        %v558 = vpop.f32.mrf.mxu0
        %v559 = vadd.f32 0.0, %v558
        %v560 = vpop.f32.mrf.mxu0
        %561 = vmatprep.mubr.bf16.mxu0 0
        %562 = vmatmul.mubr.bf16.gmra.mxu0 %v463
        %v563 = vpop.f32.mrf.mxu0
        %v564 = vadd.f32 0.0, %v563
        %v565 = vpop.f32.mrf.mxu0
        %v566 = vpop.f32.mrf.mxu0
        %v567 = vadd.f32 0.0, %v566
        %v568 = vpop.f32.mrf.mxu0
        %569 = vmatprep.mubr.bf16.mxu0 0
        %570 = vmatmul.mubr.bf16.gmra.mxu0 %v466
        %v571 = vpop.f32.mrf.mxu0
        %v572 = vadd.f32 0.0, %v571
        %v573 = vpop.f32.mrf.mxu0
        %v574 = vpop.f32.mrf.mxu0
        %v575 = vadd.f32 0.0, %v574
        %v576 = vpop.f32.mrf.mxu0
        %577 = vmatprep.mubr.bf16.mxu0 0
        %578 = vmatmul.mubr.bf16.gmra.mxu0 %v469
        %v579 = vpop.f32.mrf.mxu0
        %v580 = vadd.f32 0.0, %v579
        %v581 = vpop.f32.mrf.mxu0
        %v582 = vpop.f32.mrf.mxu0
        %v583 = vadd.f32 0.0, %v582
        %v584 = vpop.f32.mrf.mxu0
        %585 = vmatprep.mubr.bf16.mxu0 0
        %586 = vmatmul.mubr.bf16.gmra.mxu0 %v472
        %v587 = vpop.f32.mrf.mxu0
        %v588 = vadd.f32 0.0, %v587
        %v589 = vpop.f32.mrf.mxu0
        %v590 = vpop.f32.mrf.mxu0
        %v591 = vadd.f32 0.0, %v590
        %v592 = vpop.f32.mrf.mxu0
        %593 = vmatprep.mubr.bf16.mxu0 0
        %594 = vmatmul.mubr.bf16.gmra.mxu0 %v475
        %v595 = vpop.f32.mrf.mxu0
        %v596 = vadd.f32 0.0, %v595
        %v597 = vpop.f32.mrf.mxu0
        %v598 = vpop.f32.mrf.mxu0
        %v599 = vadd.f32 0.0, %v598
        %v600 = vpop.f32.mrf.mxu0
        %601 = vmatprep.mubr.bf16.mxu0 0
        %602 = vmatmul.mubr.bf16.gmra.mxu0 %v478
        %v603 = vpop.f32.mrf.mxu0
        %v604 = vadd.f32 0.0, %v603
        %v605 = vpop.f32.mrf.mxu0
        %v606 = vpop.f32.mrf.mxu0
        %v607 = vadd.f32 0.0, %v606
        %v608 = vpop.f32.mrf.mxu0
        %609 = vmatprep.mubr.bf16.mxu0 0
        %610 = vmatmul.mubr.bf16.gmra.mxu0 %v481
        %v611 = vpop.f32.mrf.mxu0
        %v612 = vadd.f32 0.0, %v611
        %v613 = vpop.f32.mrf.mxu0
        %v614 = vpop.f32.mrf.mxu0
        %v615 = vadd.f32 0.0, %v614
        %v616 = vpop.f32.mrf.mxu0
        %617 = vmatprep.mubr.bf16.mxu0 0
        %618 = vmatmul.mubr.bf16.gmra.mxu0 %v484
        %v619 = vpop.f32.mrf.mxu0
        %v620 = vadd.f32 0.0, %v619
        %v621 = vpop.f32.mrf.mxu0
        %v622 = vpop.f32.mrf.mxu0
        %v623 = vadd.f32 0.0, %v622
        %v624 = vpop.f32.mrf.mxu0
        %625 = vmatprep.mubr.bf16.mxu0 0
        %626 = vmatmul.mubr.bf16.gmra.mxu0 %v487
        %v627 = vpop.f32.mrf.mxu0
        %v628 = vadd.f32 0.0, %v627
        %v629 = vpop.f32.mrf.mxu0
        %v630 = vpop.f32.mrf.mxu0
        %v631 = vadd.f32 0.0, %v630
        %v632 = vpop.f32.mrf.mxu0
        %633 = vmatprep.mubr.bf16.mxu0 0
        %634 = vmatmul.mubr.bf16.gmra.mxu0 %v490
        %v635 = vpop.f32.mrf.mxu0
        %v636 = vadd.f32 0.0, %v635
        %v637 = vpop.f32.mrf.mxu0
        %v638 = vpop.f32.mrf.mxu0
        %v639 = vadd.f32 0.0, %v638
        %v640 = vpop.f32.mrf.mxu0
        %641 = vmatprep.mubr.bf16.mxu0 0
        %642 = vmatmul.mubr.bf16.gmra.mxu0 %v493
        %v643 = vpop.f32.mrf.mxu0
        %v644 = vadd.f32 0.0, %v643
        %v645 = vpop.f32.mrf.mxu0
        %v646 = vpop.f32.mrf.mxu0
        %v647 = vadd.f32 0.0, %v646
        %v648 = vpop.f32.mrf.mxu0
        %649 = vmatprep.mubr.bf16.mxu0 0
        %650 = vmatmul.mubr.bf16.gmra.mxu0 %v496
        %v651 = vpop.f32.mrf.mxu0
        %v652 = vadd.f32 0.0, %v651
        %v653 = vpop.f32.mrf.mxu0
        %v654 = vpop.f32.mrf.mxu0
        %v655 = vadd.f32 0.0, %v654
        %v656 = vpop.f32.mrf.mxu0
        %657 = vmatprep.mubr.bf16.mxu0 0
        %658 = vmatmul.mubr.bf16.gmra.mxu0 %v499
        %v659 = vpop.f32.mrf.mxu0
        %v660 = vadd.f32 0.0, %v659
        %v661 = vpop.f32.mrf.mxu0
        %v662 = vpop.f32.mrf.mxu0
        %v663 = vadd.f32 0.0, %v662
        %v664 = vpop.f32.mrf.mxu0
        %665 = vdwg.mxu0
        %v666 = vadd.f32 %v288, %v540
        %v667 = vadd.f32 %v289, %v543
        %v668 = vadd.f32 %v290, %v548
        %v669 = vadd.f32 %v291, %v551
        %v670 = vadd.f32 %v292, %v556
        %v671 = vadd.f32 %v293, %v559
        %v672 = vadd.f32 %v294, %v564
        %v673 = vadd.f32 %v295, %v567
        %v674 = vadd.f32 %v296, %v572
        %v675 = vadd.f32 %v297, %v575
        %v676 = vadd.f32 %v298, %v580
        %v677 = vadd.f32 %v299, %v583
        %v678 = vadd.f32 %v300, %v588
        %v679 = vadd.f32 %v301, %v591
        %v680 = vadd.f32 %v302, %v596
        %v681 = vadd.f32 %v303, %v599
        %v682 = vadd.f32 %v304, %v604
        %v683 = vadd.f32 %v305, %v607
        %v684 = vadd.f32 %v306, %v612
        %v685 = vadd.f32 %v307, %v615
        %v686 = vadd.f32 %v308, %v620
        %v687 = vadd.f32 %v309, %v623
        %v688 = vadd.f32 %v310, %v628
        %v689 = vadd.f32 %v311, %v631
        %v690 = vadd.f32 %v312, %v636
        %v691 = vadd.f32 %v313, %v639
        %v692 = vadd.f32 %v314, %v644
        %v693 = vadd.f32 %v315, %v647
        %v694 = vadd.f32 %v316, %v652
        %v695 = vadd.f32 %v317, %v655
        %v696 = vadd.f32 %v318, %v660
        %v697 = vadd.f32 %v319, %v663
        %698 = vst [vmem:[#allocation2] sm:$0xff] %v666
        %699 = vst [vmem:[#allocation2 + $0x8] sm:$0xff] %v667
        %700 = vst [vmem:[#allocation2 + $0x10] sm:$0xff] %v668
        %701 = vst [vmem:[#allocation2 + $0x18] sm:$0xff] %v669
        %702 = vst [vmem:[#allocation2 + $0x20] sm:$0xff] %v670
        %703 = vst [vmem:[#allocation2 + $0x28] sm:$0xff] %v671
        %704 = vst [vmem:[#allocation2 + $0x30] sm:$0xff] %v672
        %705 = vst [vmem:[#allocation2 + $0x38] sm:$0xff] %v673
        %706 = vst [vmem:[#allocation2 + $0x40] sm:$0xff] %v674
        %707 = vst [vmem:[#allocation2 + $0x48] sm:$0xff] %v675
        %708 = vst [vmem:[#allocation2 + $0x50] sm:$0xff] %v676
        %709 = vst [vmem:[#allocation2 + $0x58] sm:$0xff] %v677
        %710 = vst [vmem:[#allocation2 + $0x60] sm:$0xff] %v678
        %711 = vst [vmem:[#allocation2 + $0x68] sm:$0xff] %v679
        %712 = vst [vmem:[#allocation2 + $0x70] sm:$0xff] %v680
        %713 = vst [vmem:[#allocation2 + $0x78] sm:$0xff] %v681
        %714 = vst [vmem:[#allocation2 + $0x80] sm:$0xff] %v682
        %715 = vst [vmem:[#allocation2 + $0x88] sm:$0xff] %v683
        %716 = vst [vmem:[#allocation2 + $0x90] sm:$0xff] %v684
        %717 = vst [vmem:[#allocation2 + $0x98] sm:$0xff] %v685
        %718 = vst [vmem:[#allocation2 + $0xa0] sm:$0xff] %v686
        %719 = vst [vmem:[#allocation2 + $0xa8] sm:$0xff] %v687
        %720 = vst [vmem:[#allocation2 + $0xb0] sm:$0xff] %v688
        %721 = vst [vmem:[#allocation2 + $0xb8] sm:$0xff] %v689
        %722 = vst [vmem:[#allocation2 + $0xc0] sm:$0xff] %v690
        %723 = vst [vmem:[#allocation2 + $0xc8] sm:$0xff] %v691
        %724 = vst [vmem:[#allocation2 + $0xd0] sm:$0xff] %v692
        %725 = vst [vmem:[#allocation2 + $0xd8] sm:$0xff] %v693
        %726 = vst [vmem:[#allocation2 + $0xe0] sm:$0xff] %v694
        %727 = vst [vmem:[#allocation2 + $0xe8] sm:$0xff] %v695
        %728 = vst [vmem:[#allocation2 + $0xf0] sm:$0xff] %v696
        %729 = vst [vmem:[#allocation2 + $0xf8] sm:$0xff] %v697
        // Predicated region
        $region37: #{tpu_custom_call.1} parent=31 // pred_check
          %p730 = pneg %p252
        $region38: #{tpu_custom_call.1} parent=31 // pred_check_branch
          %732 = sbr.rel (%p730) target = $region40
        $region39: #{tpu_custom_call.1} parent=31 // pred_region
          %v733 = vld [vmem:[#allocation2] sm:$0xff]
          %v734 = vld [vmem:[#allocation2 + $0x8] sm:$0xff]
          %v735 = vld [vmem:[#allocation2 + $0x10] sm:$0xff]
          %v736 = vld [vmem:[#allocation2 + $0x18] sm:$0xff]
          %v737 = vld [vmem:[#allocation2 + $0x20] sm:$0xff]
          %v738 = vld [vmem:[#allocation2 + $0x28] sm:$0xff]
          %v739 = vld [vmem:[#allocation2 + $0x30] sm:$0xff]
          %v740 = vld [vmem:[#allocation2 + $0x38] sm:$0xff]
          %v741 = vld [vmem:[#allocation2 + $0x40] sm:$0xff]
          %v742 = vld [vmem:[#allocation2 + $0x48] sm:$0xff]
          %v743 = vld [vmem:[#allocation2 + $0x50] sm:$0xff]
          %v744 = vld [vmem:[#allocation2 + $0x58] sm:$0xff]
          %v745 = vld [vmem:[#allocation2 + $0x60] sm:$0xff]
          %v746 = vld [vmem:[#allocation2 + $0x68] sm:$0xff]
          %v747 = vld [vmem:[#allocation2 + $0x70] sm:$0xff]
          %v748 = vld [vmem:[#allocation2 + $0x78] sm:$0xff]
          %v749 = vld [vmem:[#allocation2 + $0x80] sm:$0xff]
          %v750 = vld [vmem:[#allocation2 + $0x88] sm:$0xff]
          %v751 = vld [vmem:[#allocation2 + $0x90] sm:$0xff]
          %v752 = vld [vmem:[#allocation2 + $0x98] sm:$0xff]
          %v753 = vld [vmem:[#allocation2 + $0xa0] sm:$0xff]
          %v754 = vld [vmem:[#allocation2 + $0xa8] sm:$0xff]
          %v755 = vld [vmem:[#allocation2 + $0xb0] sm:$0xff]
          %v756 = vld [vmem:[#allocation2 + $0xb8] sm:$0xff]
          %v757 = vld [vmem:[#allocation2 + $0xc0] sm:$0xff]
          %v758 = vld [vmem:[#allocation2 + $0xc8] sm:$0xff]
          %v759 = vld [vmem:[#allocation2 + $0xd0] sm:$0xff]
          %v760 = vld [vmem:[#allocation2 + $0xd8] sm:$0xff]
          %v761 = vld [vmem:[#allocation2 + $0xe0] sm:$0xff]
          %v762 = vld [vmem:[#allocation2 + $0xe8] sm:$0xff]
          %v763 = vld [vmem:[#allocation2 + $0xf0] sm:$0xff]
          %v764 = vld [vmem:[#allocation2 + $0xf8] sm:$0xff]
          %v765 = vld [vmem:[%s249] sm:$0x1]
          %v767 = vlaneseq
          %v768 = vshrl.u32 %v767, 7
          %v769 = vsub.s32 0, %v768
          %v770 = vrot.slane %v765, %v769
          %v772 = vadd.f32 %v733, %v770
          %v773 = vadd.f32 %v734, %v770
          %v774 = vadd.f32 %v735, %v770
          %v775 = vadd.f32 %v736, %v770
          %v776 = vadd.f32 %v737, %v770
          %v777 = vadd.f32 %v738, %v770
          %v778 = vadd.f32 %v739, %v770
          %v779 = vadd.f32 %v740, %v770
          %v780 = vadd.f32 %v741, %v770
          %v781 = vadd.f32 %v742, %v770
          %v782 = vadd.f32 %v743, %v770
          %v783 = vadd.f32 %v744, %v770
          %v784 = vadd.f32 %v745, %v770
          %v785 = vadd.f32 %v746, %v770
          %v786 = vadd.f32 %v747, %v770
          %v787 = vadd.f32 %v748, %v770
          %v788 = vadd.f32 %v749, %v770
          %v789 = vadd.f32 %v750, %v770
          %v790 = vadd.f32 %v751, %v770
          %v791 = vadd.f32 %v752, %v770
          %v792 = vadd.f32 %v753, %v770
          %v793 = vadd.f32 %v754, %v770
          %v794 = vadd.f32 %v755, %v770
          %v795 = vadd.f32 %v756, %v770
          %v796 = vadd.f32 %v757, %v770
          %v797 = vadd.f32 %v758, %v770
          %v798 = vadd.f32 %v759, %v770
          %v799 = vadd.f32 %v760, %v770
          %v800 = vadd.f32 %v761, %v770
          %v801 = vadd.f32 %v762, %v770
          %v802 = vadd.f32 %v763, %v770
          %v803 = vadd.f32 %v764, %v770
          %v804 = vmax.f32 %v772, 0.0
          %v805 = vmax.f32 %v773, 0.0
          %v806 = vmax.f32 %v774, 0.0
          %v807 = vmax.f32 %v775, 0.0
          %v808 = vmax.f32 %v776, 0.0
          %v809 = vmax.f32 %v777, 0.0
          %v810 = vmax.f32 %v778, 0.0
          %v811 = vmax.f32 %v779, 0.0
          %v812 = vmax.f32 %v780, 0.0
          %v813 = vmax.f32 %v781, 0.0
          %v814 = vmax.f32 %v782, 0.0
          %v815 = vmax.f32 %v783, 0.0
          %v816 = vmax.f32 %v784, 0.0
          %v817 = vmax.f32 %v785, 0.0
          %v818 = vmax.f32 %v786, 0.0
          %v819 = vmax.f32 %v787, 0.0
          %v820 = vmax.f32 %v788, 0.0
          %v821 = vmax.f32 %v789, 0.0
          %v822 = vmax.f32 %v790, 0.0
          %v823 = vmax.f32 %v791, 0.0
          %v824 = vmax.f32 %v792, 0.0
          %v825 = vmax.f32 %v793, 0.0
          %v826 = vmax.f32 %v794, 0.0
          %v827 = vmax.f32 %v795, 0.0
          %v828 = vmax.f32 %v796, 0.0
          %v829 = vmax.f32 %v797, 0.0
          %v830 = vmax.f32 %v798, 0.0
          %v831 = vmax.f32 %v799, 0.0
          %v832 = vmax.f32 %v800, 0.0
          %v833 = vmax.f32 %v801, 0.0
          %v834 = vmax.f32 %v802, 0.0
          %v835 = vmax.f32 %v803, 0.0
          %v836 = vpack.c.bf16 %v805, %v804
          %v837 = vpack.c.bf16 %v807, %v806
          %v838 = vpack.c.bf16 %v809, %v808
          %v839 = vpack.c.bf16 %v811, %v810
          %v840 = vpack.c.bf16 %v813, %v812
          %v841 = vpack.c.bf16 %v815, %v814
          %v842 = vpack.c.bf16 %v817, %v816
          %v843 = vpack.c.bf16 %v819, %v818
          %v844 = vpack.c.bf16 %v821, %v820
          %v845 = vpack.c.bf16 %v823, %v822
          %v846 = vpack.c.bf16 %v825, %v824
          %v847 = vpack.c.bf16 %v827, %v826
          %v848 = vpack.c.bf16 %v829, %v828
          %v849 = vpack.c.bf16 %v831, %v830
          %v850 = vpack.c.bf16 %v833, %v832
          %v851 = vpack.c.bf16 %v835, %v834
          %v868 = vunpack.c.l.b16 %v836
          %v869 = vunpack.c.h.b16 %v836
          %v870 = vunpack.c.l.b16 %v837
          %v871 = vunpack.c.h.b16 %v837
          %v872 = vunpack.c.l.b16 %v838
          %v873 = vunpack.c.h.b16 %v838
          %v874 = vunpack.c.l.b16 %v839
          %v875 = vunpack.c.h.b16 %v839
          %v876 = vunpack.c.l.b16 %v840
          %v877 = vunpack.c.h.b16 %v840
          %v878 = vunpack.c.l.b16 %v841
          %v879 = vunpack.c.h.b16 %v841
          %v880 = vunpack.c.l.b16 %v842
          %v881 = vunpack.c.h.b16 %v842
          %v882 = vunpack.c.l.b16 %v843
          %v883 = vunpack.c.h.b16 %v843
          %v884 = vunpack.c.l.b16 %v844
          %v885 = vunpack.c.h.b16 %v844
          %v886 = vunpack.c.l.b16 %v845
          %v887 = vunpack.c.h.b16 %v845
          %v888 = vunpack.c.l.b16 %v846
          %v889 = vunpack.c.h.b16 %v846
          %v890 = vunpack.c.l.b16 %v847
          %v891 = vunpack.c.h.b16 %v847
          %v892 = vunpack.c.l.b16 %v848
          %v893 = vunpack.c.h.b16 %v848
          %v894 = vunpack.c.l.b16 %v849
          %v895 = vunpack.c.h.b16 %v849
          %v896 = vunpack.c.l.b16 %v850
          %v897 = vunpack.c.h.b16 %v850
          %v898 = vunpack.c.l.b16 %v851
          %v899 = vunpack.c.h.b16 %v851
          %v900 = vpack.c.b16 %v868, %v868
          %v901 = vpack.c.b16 %v869, %v869
          %v902 = vpack.c.b16 %v870, %v870
          %v903 = vpack.c.b16 %v871, %v871
          %v904 = vpack.c.b16 %v872, %v872
          %v905 = vpack.c.b16 %v873, %v873
          %v906 = vpack.c.b16 %v874, %v874
          %v907 = vpack.c.b16 %v875, %v875
          %v908 = vpack.c.b16 %v876, %v876
          %v909 = vpack.c.b16 %v877, %v877
          %v910 = vpack.c.b16 %v878, %v878
          %v911 = vpack.c.b16 %v879, %v879
          %v912 = vpack.c.b16 %v880, %v880
          %v913 = vpack.c.b16 %v881, %v881
          %v914 = vpack.c.b16 %v882, %v882
          %v915 = vpack.c.b16 %v883, %v883
          %v916 = vpack.c.b16 %v884, %v884
          %v917 = vpack.c.b16 %v885, %v885
          %v918 = vpack.c.b16 %v886, %v886
          %v919 = vpack.c.b16 %v887, %v887
          %v920 = vpack.c.b16 %v888, %v888
          %v921 = vpack.c.b16 %v889, %v889
          %v922 = vpack.c.b16 %v890, %v890
          %v923 = vpack.c.b16 %v891, %v891
          %v924 = vpack.c.b16 %v892, %v892
          %v925 = vpack.c.b16 %v893, %v893
          %v926 = vpack.c.b16 %v894, %v894
          %v927 = vpack.c.b16 %v895, %v895
          %v928 = vpack.c.b16 %v896, %v896
          %v929 = vpack.c.b16 %v897, %v897
          %v930 = vpack.c.b16 %v898, %v898
          %v931 = vpack.c.b16 %v899, %v899
          %964 = vst [vmem:[%s228] sm:$0xf] %v900
          %965 = vst [vmem:[%s228 + $0x4] sm:$0xf] %v901
          %966 = vst [vmem:[%s228 + $0x8] sm:$0xf] %v902
          %967 = vst [vmem:[%s228 + $0xc] sm:$0xf] %v903
          %968 = vst [vmem:[%s228 + $0x10] sm:$0xf] %v904
          %969 = vst [vmem:[%s228 + $0x14] sm:$0xf] %v905
          %970 = vst [vmem:[%s228 + $0x18] sm:$0xf] %v906
          %971 = vst [vmem:[%s228 + $0x1c] sm:$0xf] %v907
          %972 = vst [vmem:[%s228 + $0x20] sm:$0xf] %v908
          %973 = vst [vmem:[%s228 + $0x24] sm:$0xf] %v909
          %974 = vst [vmem:[%s228 + $0x28] sm:$0xf] %v910
          %975 = vst [vmem:[%s228 + $0x2c] sm:$0xf] %v911
          %976 = vst [vmem:[%s228 + $0x30] sm:$0xf] %v912
          %977 = vst [vmem:[%s228 + $0x34] sm:$0xf] %v913
          %978 = vst [vmem:[%s228 + $0x38] sm:$0xf] %v914
          %979 = vst [vmem:[%s228 + $0x3c] sm:$0xf] %v915
          %980 = vst [vmem:[%s228 + $0x40] sm:$0xf] %v916
          %981 = vst [vmem:[%s228 + $0x44] sm:$0xf] %v917
          %982 = vst [vmem:[%s228 + $0x48] sm:$0xf] %v918
          %983 = vst [vmem:[%s228 + $0x4c] sm:$0xf] %v919
          %984 = vst [vmem:[%s228 + $0x50] sm:$0xf] %v920
          %985 = vst [vmem:[%s228 + $0x54] sm:$0xf] %v921
          %986 = vst [vmem:[%s228 + $0x58] sm:$0xf] %v922
          %987 = vst [vmem:[%s228 + $0x5c] sm:$0xf] %v923
          %988 = vst [vmem:[%s228 + $0x60] sm:$0xf] %v924
          %989 = vst [vmem:[%s228 + $0x64] sm:$0xf] %v925
          %990 = vst [vmem:[%s228 + $0x68] sm:$0xf] %v926
          %991 = vst [vmem:[%s228 + $0x6c] sm:$0xf] %v927
          %992 = vst [vmem:[%s228 + $0x70] sm:$0xf] %v928
          %993 = vst [vmem:[%s228 + $0x74] sm:$0xf] %v929
          %994 = vst [vmem:[%s228 + $0x78] sm:$0xf] %v930
          %995 = vst [vmem:[%s228 + $0x7c] sm:$0xf] %v931
        $region40: #{tpu_custom_call.1} parent=31 // pred_fallthru
          _
        %s996 = sand.u32 %s128, 1
        %s997 = scalar_lea.sflag [#allocation4], %s996
        %s998 = sand.u32 %s128, 1
        %s999 = smul.addr %s998, 128
        %s1000 = scalar_lea.vmem [#allocation3], %s999
        // Predicated region
        $region41: #{tpu_custom_call.1} parent=31 // pred_check
          %p1001 = pneg %p138
        $region42: #{tpu_custom_call.1} parent=31 // pred_check_branch
          %1003 = sbr.rel (%p1001) target = $region44
        $region43: #{tpu_custom_call.1} parent=31 // pred_region
          %s1004 = smul.u32 32, %s22
          %s1006 = ssub.s32 2048, 2048
          %1007 = vsyncadd %s997, %s1006
          %s1008 = sadd.s32 %s23, %s1004
          %s1009 = smul.addr %s1008, 64
          %s1010 = scalar_lea.hbm %s3, %s1009
          %s1011 = sshll.u32 %s1000, 4
          %s1012 = int_to_ptr.vmem [resolvable:$true] %s1011
          %1017 = dma.vmem_to_hbm [thread:$0]  %s1012, 2048, %s1010, %s997, 64, 64, 4
        $region44: #{tpu_custom_call.1} parent=31 // pred_fallthru
          _
      $region32: #{tpu_custom_call.1} parent=5 // pred_fallthru
        _
      %p1018 = scmp.le.s32.totalorder 2, %s12
      // Predicated region
      $region45: #{tpu_custom_call.1} parent=5 // pred_check
        %p1019 = pneg %p1018
      $region46: #{tpu_custom_call.1} parent=5 // pred_check_branch
        %1021 = sbr.rel (%p1019) target = $region48
      $region47: #{tpu_custom_call.1} parent=5 // pred_region
        %s1022 = ssub.s32 %s12, 2
        // Predicated region
        $region49: #{tpu_custom_call.1} parent=47 // pred_check
          %p1023 = pneg %p144
        $region50: #{tpu_custom_call.1} parent=47 // pred_check_branch
          %1025 = sbr.rel (%p1023) target = $region52
        $region51: #{tpu_custom_call.1} parent=47 // pred_region
          %s1026 = sand.u32 %s129, 1
          %s1027 = scalar_lea.sflag [#allocation4], %s1026
          %s1028 = sand.u32 %s129, 1
          %s1029 = smul.addr %s1028, 128
          %s1030 = scalar_lea.vmem [#allocation3], %s1029
          %1031 = dma.done %s1027, 2048
        $region52: #{tpu_custom_call.1} parent=47 // pred_fallthru
          _
      $region48: #{tpu_custom_call.1} parent=5 // pred_fallthru
        _
    $region6: #{tpu_custom_call.1} parent=1 // loop_footer
      %s16 = sadd.s32 1, %s12
    $region7: #{tpu_custom_call.1} parent=1 // loop_footer_branch
      %11 = sbr.rel target = $region3
    $region8: #{tpu_custom_call.1} parent=1 // loop_exit
      _
    %1032 = vsyncpa [#allocation4], 1
    %s1033 = scalar_lea.sflag [#allocation4], 1
    %1034 = vsyncpa %s1033, 1

</llo_original>
